<compile_context>
chip_gen: v5e
topology: v5e:2x2
jax: 0.10.0
libtpu: 0.0.40
codegen_flags: <defaults>
</compile_context>

<pallas_src>
import jax
import jax.numpy as jnp
from jax import lax
from jax.experimental import pallas as pl
from jax.experimental.pallas import tpu as pltpu

LANES = 128
TARGET_TILE_ROWS = 8192   # rows per grid step per input (4 MiB f32) — multiple of 32
BIG_CHUNK_ROWS = 32       # inner-loop vreg chunk (4 f32 vregs)
SMALL_CHUNK_ROWS = 8      # fallback chunk for tiny inputs


def _tensorcore_layout():
    """Return (ncores, use_core_parallel) for splitting the reduction.

    v7x has 2 TensorCores per chip and needs an explicit CORE_PARALLEL grid
    axis to use both; v5e/v6e are single-TC, so a size-1 axis avoids the
    phantom-step DMA waste entirely.
    """
    try:
        kind = jax.devices()[0].device_kind.lower()
    except Exception:
        return 1, False
    if "v7" in kind:
        return 2, True
    return 1, False


def _make_kernel(*, tile_rows, chunk_rows, rows_valid, steps_per_core, need_row_mask):
    n_chunks = tile_rows // chunk_rows
    unroll = min(8, n_chunks)

    def kernel(o_ref, t_ref, w_ref, acc_ref):
        s = pl.program_id(1)
        step = pl.program_id(0) * steps_per_core + s
        row0 = step * tile_rows  # global row offset of this (unclamped) tile

        @pl.when(s == 0)
        def _():
            acc_ref[...] = jnp.zeros_like(acc_ref)

        def accumulate(masked):
            # Hoisted out of the fori_loop (JAX does not CSE broadcast_in_dim).
            row_iota = (lax.broadcasted_iota(jnp.int32, (chunk_rows, LANES), 0)
                        if masked else None)

            def body(j, acc):
                r = pl.multiple_of(j * chunk_rows, chunk_rows)
                o = o_ref[pl.ds(r, chunk_rows), :].astype(jnp.float32)
                t = t_ref[pl.ds(r, chunk_rows), :].astype(jnp.float32)
                w = w_ref[pl.ds(r, chunk_rows), :].astype(jnp.float32)
                d = o - t
                v = d * d * w
                if masked:
                    # Select (NOT multiply): overhang rows of the last tile hold
                    # undefined VMEM data that could be NaN/Inf.
                    rows = row_iota + (row0 + r)
                    v = jnp.where(rows < rows_valid, v, jnp.float32(0.0))
                return acc + v

            return lax.fori_loop(
                0, n_chunks, body,
                jnp.zeros((chunk_rows, LANES), jnp.float32),
                unroll=unroll)

        if need_row_mask:
            tile_has_pad = (row0 + tile_rows) > rows_valid

            @pl.when(jnp.logical_not(tile_has_pad))
            def _():
                acc_ref[...] += accumulate(False)

            @pl.when(tile_has_pad)
            def _():
                acc_ref[...] += accumulate(True)
        else:
            acc_ref[...] += accumulate(False)

    return kernel


def custom_loss(output, targets, confidence):
    """Pallas TPU implementation of mean(square(output - targets) * confidence)."""
    assert output.shape == targets.shape == confidence.shape
    n = output.size
    out_dtype = jnp.result_type(output.dtype, targets.dtype, confidence.dtype)

    flat_o = output.reshape(-1)
    flat_t = targets.reshape(-1)
    flat_c = confidence.reshape(-1)

    rows_full = n // LANES
    total = jnp.float32(0.0)
    tail_start = 0

    if rows_full >= SMALL_CHUNK_ROWS:
        bulk = rows_full * LANES
        if bulk != n:
            # TODO(synk): for element counts not a multiple of 128 this prefix
            # slice materializes one extra copy of the bulk (~3x HBM traffic);
            # a rank-1-block kernel path would remove it.
            o2 = flat_o[:bulk].reshape(rows_full, LANES)
            t2 = flat_t[:bulk].reshape(rows_full, LANES)
            c2 = flat_c[:bulk].reshape(rows_full, LANES)
        else:
            o2 = flat_o.reshape(rows_full, LANES)
            t2 = flat_t.reshape(rows_full, LANES)
            c2 = flat_c.reshape(rows_full, LANES)

        chunk_rows = BIG_CHUNK_ROWS if rows_full >= BIG_CHUNK_ROWS else SMALL_CHUNK_ROWS
        # tile_rows <= rows_full, multiple of chunk_rows (so only the LAST tile
        # can overhang the array; overhang rows are masked in-kernel).
        tile_rows = min(TARGET_TILE_ROWS, (rows_full // chunk_rows) * chunk_rows)
        num_tiles = pl.cdiv(rows_full, tile_rows)

        ncores_hw, use_core_parallel = _tensorcore_layout()
        ncores = ncores_hw if num_tiles >= ncores_hw else 1
        use_core_parallel = use_core_parallel and ncores > 1
        steps_per_core = pl.cdiv(num_tiles, ncores)
        # Mask whenever the (possibly padded) grid covers more rows than exist.
        need_row_mask = (ncores * steps_per_core * tile_rows) != rows_full

        in_spec = pl.BlockSpec(
            (tile_rows, LANES),
            lambda c, s: (jnp.minimum(c * steps_per_core + s, num_tiles - 1), 0))
        out_spec = pl.BlockSpec((chunk_rows, LANES), lambda c, s: (c, 0))

        kernel = _make_kernel(
            tile_rows=tile_rows,
            chunk_rows=chunk_rows,
            rows_valid=rows_full,
            steps_per_core=steps_per_core,
            need_row_mask=need_row_mask)

        # 3 inputs x 2 pipeline buffers x tile bytes + headroom for the tiny
        # output block and compiler scratch.  Raises v5e's 16 MiB scoped
        # default when needed, stays within the v6e/v7x 32 MiB default for
        # f32 8192-row tiles (24 MiB + 4 MiB headroom).
        itemsize = max(jnp.dtype(a.dtype).itemsize for a in (o2, t2, c2))
        vmem_limit = int(3 * 2 * tile_rows * LANES * itemsize + (4 << 20))
        vmem_limit = max(16 << 20, min(vmem_limit, 100 << 20))

        first_axis = pltpu.CORE_PARALLEL if use_core_parallel else pltpu.ARBITRARY

        partials = pl.pallas_call(
            kernel,
            out_shape=jax.ShapeDtypeStruct((ncores * chunk_rows, LANES), jnp.float32),
            grid_spec=pltpu.PrefetchScalarGridSpec(
                num_scalar_prefetch=0,
                grid=(ncores, steps_per_core),
                in_specs=[in_spec, in_spec, in_spec],
                out_specs=out_spec,
            ),
            compiler_params=pltpu.CompilerParams(
                dimension_semantics=(first_axis, pltpu.ARBITRARY),
                vmem_limit_bytes=vmem_limit),
        )(o2, t2, c2)

        total = total + jnp.sum(partials)
        tail_start = bulk

    if tail_start < n:
        # Ragged tail (< 128 elements, or the whole thing if it is tiny):
        # negligible work, done in plain JAX.
        to = flat_o[tail_start:].astype(jnp.float32)
        tt = flat_t[tail_start:].astype(jnp.float32)
        tc = flat_c[tail_start:].astype(jnp.float32)
        total = total + jnp.sum(jnp.square(to - tt) * tc)

    return (total / jnp.float32(n)).astype(out_dtype)


if __name__ == "__main__":
    key = jax.random.PRNGKey(0)
    k1, k2, k3 = jax.random.split(key, 3)

    loss_fn = jax.jit(custom_loss)

    # 1) Shapes consistent with the module: three same-shaped tensors (aligned).
    shape = (2, 4, 16, 16)
    output = jax.random.normal(k1, shape, dtype=jnp.float32)
    targets = jax.random.normal(k2, shape, dtype=jnp.float32)
    confidence = jax.random.uniform(k3, shape, dtype=jnp.float32)

    loss = loss_fn(output, targets, confidence)
    jax.block_until_ready(loss)
    ref = jnp.mean(jnp.square(output - targets) * confidence)
    assert jnp.allclose(loss, ref, rtol=1e-5, atol=1e-6), (loss, ref)

    # 2) Non-128-aligned size exercises the in-kernel row mask and the
    #    plain-JAX tail path.
    shape2 = (3, 5, 7, 11)
    o2 = jax.random.normal(k1, shape2, dtype=jnp.float32)
    t2 = jax.random.normal(k2, shape2, dtype=jnp.float32)
    c2 = jax.random.uniform(k3, shape2, dtype=jnp.float32)
    loss2 = loss_fn(o2, t2, c2)
    jax.block_until_ready(loss2)
    ref2 = jnp.mean(jnp.square(o2 - t2) * c2)
    assert jnp.allclose(loss2, ref2, rtol=1e-5, atol=1e-6), (loss2, ref2)

    # 3) Aligned but multi-tile (rows=72, tile=64): exercises the accumulator
    #    across grid steps plus the masked last tile / unmasked fast path.
    shape3 = (3, 24, 128)
    o3 = jax.random.normal(k1, shape3, dtype=jnp.float32)
    t3 = jax.random.normal(k2, shape3, dtype=jnp.float32)
    c3 = jax.random.uniform(k3, shape3, dtype=jnp.float32)
    loss3 = loss_fn(o3, t3, c3)
    jax.block_until_ready(loss3)
    ref3 = jnp.mean(jnp.square(o3 - t3) * c3)
    assert jnp.allclose(loss3, ref3, rtol=1e-5, atol=1e-6), (loss3, ref3)

    print("KERNEL_OK")
</pallas_src>

<mosaic_0001>
module attributes {stable_mosaic.version = 11 : i64} {
  func.func @kernel(%arg0: i32, %arg1: i32, %arg2: memref<16x128xf32, #tpu.memory_space<vmem>>, %arg3: memref<16x128xf32, #tpu.memory_space<vmem>>, %arg4: memref<16x128xf32, #tpu.memory_space<vmem>>, %arg5: memref<8x128xf32, #tpu.memory_space<vmem>>) attributes {dimension_semantics = [#tpu.dimension_semantics<arbitrary>, #tpu.dimension_semantics<arbitrary>], iteration_bounds = array<i64: 1, 1>, scalar_prefetch = 0 : i64, scratch_operands = 0 : i64, tpu.core_type = #tpu.core_type<tc>, window_params = [{transform_indices = @transform_0, window_bounds = array<i64: 16, 128>}, {transform_indices = @transform_1, window_bounds = array<i64: 16, 128>}, {transform_indices = @transform_2, window_bounds = array<i64: 16, 128>}, {transform_indices = @transform_3, window_bounds = array<i64: 8, 128>}]} {
    %c0_i32 = arith.constant 0 : i32
    %0 = arith.cmpi eq, %arg1, %c0_i32 : i32
    %1 = arith.extui %0 : i1 to i32
    %c0_i32_0 = arith.constant 0 : i32
    %2 = arith.cmpi ne, %1, %c0_i32_0 : i32
    scf.if %2 {
      %cst_12 = arith.constant 0.000000e+00 : f32
      %31 = vector.broadcast %cst_12 : f32 to vector<8x128xf32>
      %c0_13 = arith.constant 0 : index
      %c0_14 = arith.constant 0 : index
      %32 = vector.load %arg5[%c0_13, %c0_14] : memref<8x128xf32, #tpu.memory_space<vmem>>, vector<8x128xf32>
      tpu.vector_store %arg5[%c0_13, %c0_14], %31 {strides = array<i32>} : memref<8x128xf32, #tpu.memory_space<vmem>>, vector<8x128xf32>,
    } else {
    }
    %c0 = arith.constant 0 : index
    %c0_1 = arith.constant 0 : index
    %3 = vector.load %arg5[%c0, %c0_1] : memref<8x128xf32, #tpu.memory_space<vmem>>, vector<8x128xf32>
    %cst = arith.constant 0.000000e+00 : f32
    %4 = vector.broadcast %cst : f32 to vector<8x128xf32>
    %c0_i32_2 = arith.constant 0 : i32
    %c8_i32 = arith.constant 8 : i32
    %5 = arith.muli %c0_i32_2, %c8_i32 : i32
    %6 = tpu.assume_multiple %5, 8 : i32
    %7 = arith.index_cast %6 : i32 to index
    %c0_3 = arith.constant 0 : index
    %8 = vector.load %arg2[%7, %c0_3] : memref<16x128xf32, #tpu.memory_space<vmem>>, vector<8x128xf32>
    %9 = arith.index_cast %6 : i32 to index
    %c0_4 = arith.constant 0 : index
    %10 = vector.load %arg3[%9, %c0_4] : memref<16x128xf32, #tpu.memory_space<vmem>>, vector<8x128xf32>
    %11 = arith.index_cast %6 : i32 to index
    %c0_5 = arith.constant 0 : index
    %12 = vector.load %arg4[%11, %c0_5] : memref<16x128xf32, #tpu.memory_space<vmem>>, vector<8x128xf32>
    %13 = arith.subf %8, %10 : vector<8x128xf32>
    %14 = arith.mulf %13, %13 : vector<8x128xf32>
    %15 = arith.mulf %14, %12 : vector<8x128xf32>
    %16 = arith.addf %4, %15 : vector<8x128xf32>
    %c1_i32 = arith.constant 1 : i32
    %c8_i32_6 = arith.constant 8 : i32
    %17 = arith.muli %c1_i32, %c8_i32_6 : i32
    %18 = tpu.assume_multiple %17, 8 : i32
    %19 = arith.index_cast %18 : i32 to index
    %c0_7 = arith.constant 0 : index
    %20 = vector.load %arg2[%19, %c0_7] : memref<16x128xf32, #tpu.memory_space<vmem>>, vector<8x128xf32>
    %21 = arith.index_cast %18 : i32 to index
    %c0_8 = arith.constant 0 : index
    %22 = vector.load %arg3[%21, %c0_8] : memref<16x128xf32, #tpu.memory_space<vmem>>, vector<8x128xf32>
    %23 = arith.index_cast %18 : i32 to index
    %c0_9 = arith.constant 0 : index
    %24 = vector.load %arg4[%23, %c0_9] : memref<16x128xf32, #tpu.memory_space<vmem>>, vector<8x128xf32>
    %25 = arith.subf %20, %22 : vector<8x128xf32>
    %26 = arith.mulf %25, %25 : vector<8x128xf32>
    %27 = arith.mulf %26, %24 : vector<8x128xf32>
    %28 = arith.addf %16, %27 : vector<8x128xf32>
    %c2_i32 = arith.constant 2 : i32
    %29 = arith.addf %3, %28 : vector<8x128xf32>
    %c0_10 = arith.constant 0 : index
    %c0_11 = arith.constant 0 : index
    %30 = vector.load %arg5[%c0_10, %c0_11] : memref<8x128xf32, #tpu.memory_space<vmem>>, vector<8x128xf32>
    tpu.vector_store %arg5[%c0_10, %c0_11], %29 {strides = array<i32>} : memref<8x128xf32, #tpu.memory_space<vmem>>, vector<8x128xf32>,
    return
  }
  func.func @transform_0(%arg0: i32, %arg1: i32) -> (i32, i32) {
    %c1_i32 = arith.constant 1 : i32
    %0 = arith.muli %arg0, %c1_i32 : i32
    %1 = arith.addi %0, %arg1 : i32
    %c0_i32 = arith.constant 0 : i32
    %2 = arith.minsi %1, %c0_i32 : i32
    %c0_i32_0 = arith.constant 0 : i32
    %c0_i32_1 = arith.constant 0 : i32
    return %2, %c0_i32_0 : i32, i32
  }
  func.func @transform_1(%arg0: i32, %arg1: i32) -> (i32, i32) {
    %c1_i32 = arith.constant 1 : i32
    %0 = arith.muli %arg0, %c1_i32 : i32
    %1 = arith.addi %0, %arg1 : i32
    %c0_i32 = arith.constant 0 : i32
    %2 = arith.minsi %1, %c0_i32 : i32
    %c0_i32_0 = arith.constant 0 : i32
    %c0_i32_1 = arith.constant 0 : i32
    return %2, %c0_i32_0 : i32, i32
  }
  func.func @transform_2(%arg0: i32, %arg1: i32) -> (i32, i32) {
    %c1_i32 = arith.constant 1 : i32
    %0 = arith.muli %arg0, %c1_i32 : i32
    %1 = arith.addi %0, %arg1 : i32
    %c0_i32 = arith.constant 0 : i32
    %2 = arith.minsi %1, %c0_i32 : i32
    %c0_i32_0 = arith.constant 0 : i32
    %c0_i32_1 = arith.constant 0 : i32
    return %2, %c0_i32_0 : i32, i32
  }
  func.func @transform_3(%arg0: i32, %arg1: i32) -> (i32, i32) {
    %c0_i32 = arith.constant 0 : i32
    %c0_i32_0 = arith.constant 0 : i32
    return %arg0, %c0_i32 : i32, i32
  }
}

</mosaic_0001>

<llo_original>
// kernel: custom_loss.1
$region0: #{custom_loss.1}
  #allocation0 [shape = 'u32[]', space=smem, size = 0x4, offset = 0x4, fixed_abs, tag = 'smem constant byte address 0x4 - core index']
  #allocation1 [shape = 'u32[72,128]{1,0:T(1,128)}', space=vmem, size = 0x9000, scoped, tag = 'internal scratch']
  %s0 = inlined_call_operand.vmem [shape: f32[16,128], index: 0, kind: input, shape index: {}]
  %s1 = inlined_call_operand.vmem [shape: f32[16,128], index: 1, kind: input, shape index: {}]
  %s2 = inlined_call_operand.vmem [shape: f32[16,128], index: 2, kind: input, shape index: {}]
  %s3 = inlined_call_operand.vmem [shape: f32[8,128], index: 3, kind: output, shape index: {}]
  %s4 = sld [smem:[#allocation0]]
  $region26: #{custom_loss.1} parent=0
    _
  %s6 = ssub.s32 1, %s4
  %s7 = scalar_select 0, %s6, %s4
  // Predicated region
  $region2: #{custom_loss.1} parent=0 // pred_check
    _
  $region3: #{custom_loss.1} parent=0 // pred_check_branch
    %9 = sbr.rel (0) target = $region5
  $region4: #{custom_loss.1} parent=0 // pred_region
    %s10 = sadd.s32 0, 0
    %p11 = scmp.lt.s32.totalorder %s10, 0
    %s12 = scalar_select %p11, %s10, 0
    %s13 = smul.u32 2, %s12
    %p14 = scmp.lt.s32.totalorder %s13, 1
    %s15 = scalar_select %p14, %s13, 1
    %s16 = smul.addr %s15, 8
    %s17 = scalar_lea.vmem %s0, %s16
    %s18 = sadd.s32 0, 0
    %p19 = scmp.lt.s32.totalorder %s18, 0
    %s20 = scalar_select %p19, %s18, 0
    %s21 = smul.u32 2, %s20
  $region5: #{custom_loss.1} parent=0 // pred_fallthru
    _
  // Predicated region
  $region6: #{custom_loss.1} parent=0 // pred_check
    _
  $region7: #{custom_loss.1} parent=0 // pred_check_branch
    %23 = sbr.rel (0) target = $region9
  $region8: #{custom_loss.1} parent=0 // pred_region
    %s24 = sadd.s32 0, 0
    %p25 = scmp.lt.s32.totalorder %s24, 0
    %s26 = scalar_select %p25, %s24, 0
    %s27 = smul.u32 2, %s26
    %p28 = scmp.lt.s32.totalorder %s27, 1
    %s29 = scalar_select %p28, %s27, 1
    %s30 = smul.addr %s29, 8
    %s31 = scalar_lea.vmem %s1, %s30
    %s32 = sadd.s32 0, 0
    %p33 = scmp.lt.s32.totalorder %s32, 0
    %s34 = scalar_select %p33, %s32, 0
    %s35 = smul.u32 2, %s34
  $region9: #{custom_loss.1} parent=0 // pred_fallthru
    _
  // Predicated region
  $region10: #{custom_loss.1} parent=0 // pred_check
    _
  $region11: #{custom_loss.1} parent=0 // pred_check_branch
    %37 = sbr.rel (0) target = $region13
  $region12: #{custom_loss.1} parent=0 // pred_region
    %s38 = sadd.s32 0, 0
    %p39 = scmp.lt.s32.totalorder %s38, 0
    %s40 = scalar_select %p39, %s38, 0
    %s41 = smul.u32 2, %s40
    %p42 = scmp.lt.s32.totalorder %s41, 1
    %s43 = scalar_select %p42, %s41, 1
    %s44 = smul.addr %s43, 8
    %s45 = scalar_lea.vmem %s2, %s44
    %s46 = sadd.s32 0, 0
    %p47 = scmp.lt.s32.totalorder %s46, 0
    %s48 = scalar_select %p47, %s46, 0
    %s49 = smul.u32 2, %s48
  $region13: #{custom_loss.1} parent=0 // pred_fallthru
    _
  %s50 = sadd.s32 0, 0
  %p51 = scmp.lt.s32.totalorder %s50, 0
  %s52 = scalar_select %p51, %s50, 0
  %s53 = smul.u32 2, %s52
  %p54 = scmp.lt.s32.totalorder %s53, 1
  %s55 = scalar_select %p54, %s53, 1
  %s56 = smul.addr %s55, 8
  %s57 = scalar_lea.vmem %s0, %s56
  %s58 = sadd.s32 0, 0
  %p59 = scmp.lt.s32.totalorder %s58, 0
  %s60 = scalar_select %p59, %s58, 0
  %s61 = smul.u32 2, %s60
  %p62 = scmp.lt.s32.totalorder %s61, 1
  %s63 = scalar_select %p62, %s61, 1
  %s64 = smul.addr %s63, 8
  %s65 = scalar_lea.vmem %s1, %s64
  %s66 = sadd.s32 0, 0
  %p67 = scmp.lt.s32.totalorder %s66, 0
  %s68 = scalar_select %p67, %s66, 0
  %s69 = smul.u32 2, %s68
  %p70 = scmp.lt.s32.totalorder %s69, 1
  %s71 = scalar_select %p70, %s69, 1
  %s72 = smul.addr %s71, 8
  %s73 = scalar_lea.vmem %s2, %s72
  %s74 = sadd.s32 0, 0
  %p75 = scmp.lt.s32.totalorder %s74, 0
  %s76 = scalar_select %p75, %s74, 0
  %s77 = smul.u32 2, %s76
  %p78 = scmp.lt.s32.totalorder %s77, 1
  %s79 = scalar_select %p78, %s77, 1
  %s80 = smul.addr %s79, 8
  %s81 = scalar_lea.vmem %s0, %s80
  %s82 = sadd.s32 0, 0
  %p83 = scmp.lt.s32.totalorder %s82, 0
  %s84 = scalar_select %p83, %s82, 0
  %s85 = smul.u32 2, %s84
  %s86 = sadd.s32 0, 0
  %p87 = scmp.lt.s32.totalorder %s86, 0
  %s88 = scalar_select %p87, %s86, 0
  %s89 = smul.u32 2, %s88
  %p90 = scmp.lt.s32.totalorder %s89, 1
  %s91 = scalar_select %p90, %s89, 1
  %s92 = smul.addr %s91, 8
  %s93 = scalar_lea.vmem %s1, %s92
  %s94 = sadd.s32 0, 0
  %p95 = scmp.lt.s32.totalorder %s94, 0
  %s96 = scalar_select %p95, %s94, 0
  %s97 = smul.u32 2, %s96
  %s98 = sadd.s32 0, 0
  %p99 = scmp.lt.s32.totalorder %s98, 0
  %s100 = scalar_select %p99, %s98, 0
  %s101 = smul.u32 2, %s100
  %p102 = scmp.lt.s32.totalorder %s101, 1
  %s103 = scalar_select %p102, %s101, 1
  %s104 = smul.addr %s103, 8
  %s105 = scalar_lea.vmem %s2, %s104
  %s106 = sadd.s32 0, 0
  %p107 = scmp.lt.s32.totalorder %s106, 0
  %s108 = scalar_select %p107, %s106, 0
  %s109 = smul.u32 2, %s108
  %p110 = scmp.eq.s32.totalorder 0, 0
  // Predicated region
  $region14: #{custom_loss.1} parent=0 // pred_check
    %p111 = pneg %p110
  $region15: #{custom_loss.1} parent=0 // pred_check_branch
    %113 = sbr.rel (%p111) target = $region17
  $region16: #{custom_loss.1} parent=0 // pred_region
    %114 = vst [vmem:[%s3] sm:$0xff] 0.0
  $region17: #{custom_loss.1} parent=0 // pred_fallthru
    _
  %v115 = vld [vmem:[%s3] sm:$0xff]
  %v116 = vld [vmem:[%s81] sm:$0xff]
  %v117 = vld [vmem:[%s93] sm:$0xff]
  %v118 = vld [vmem:[%s105] sm:$0xff]
  %v119 = vsub.f32 %v116, %v117
  %v120 = vmul.f32 %v119, %v119
  %v121 = vmul.f32 %v120, %v118
  %v122 = vadd.f32 %v121, 0.0
  %s123 = scalar_lea.vmem %s81, 8
  %v124 = vld [vmem:[%s123] sm:$0xff]
  %s125 = scalar_lea.vmem %s93, 8
  %v126 = vld [vmem:[%s125] sm:$0xff]
  %s127 = scalar_lea.vmem %s105, 8
  %v128 = vld [vmem:[%s127] sm:$0xff]
  %v129 = vsub.f32 %v124, %v126
  %v130 = vmul.f32 %v129, %v129
  %v131 = vmul.f32 %v130, %v128
  %v132 = vadd.f32 %v122, %v131
  %v133 = vadd.f32 %v115, %v132
  %134 = vst [vmem:[%s3] sm:$0xff] %v133
  // Predicated region
  $region18: #{custom_loss.1} parent=0 // pred_check
    _
  $region19: #{custom_loss.1} parent=0 // pred_check_branch
    %136 = sbr.rel (0) target = $region21
  $region20: #{custom_loss.1} parent=0 // pred_region
    _
  $region21: #{custom_loss.1} parent=0 // pred_fallthru
    _
  // Predicated region
  $region22: #{custom_loss.1} parent=0 // pred_check
    _
  $region23: #{custom_loss.1} parent=0 // pred_check_branch
    %138 = sbr.rel (0) target = $region25
  $region24: #{custom_loss.1} parent=0 // pred_region
    _
  $region25: #{custom_loss.1} parent=0 // pred_fallthru
    _

</llo_original>
